<compile_context>
chip_gen: v6e
topology: v6e:2x2x1
jax: 0.10.0
libtpu: 0.0.40
codegen_flags: <defaults>
</compile_context>

<pallas_src>
import jax
import jax.numpy as jnp
from jax.experimental import pallas as pl
from jax.experimental.pallas import tpu as pltpu


def _round_up(x: int, m: int) -> int:
    return ((x + m - 1) // m) * m


def _linear_kernel(h_ref, w_ref, b_ref, o_ref):
    """One (tm, tn) output tile; full K reduction in a single MXU pass.

    h_ref: [tm, K]  compute dtype (e.g. bf16)
    w_ref: [K, tn]  compute dtype, pre-transposed -> no in-kernel transpose
    b_ref: [1, tn]  f32
    o_ref: [tm, tn] out dtype
    """
    acc = jnp.dot(h_ref[...], w_ref[...], preferred_element_type=jnp.float32)
    o_ref[...] = (acc + b_ref[...]).astype(o_ref.dtype)


def _vmem_capacity_bytes() -> int:
    try:
        return int(pltpu.get_tpu_info().vmem_capacity_bytes)
    except Exception:
        return 64 * 1024 * 1024  # conservative default (v7x per-TC VMEM)


class LinearClassifierPallas:
    """Pallas TPU equivalent of OpenLP's LinearClassifier forward pass.

    Weight/bias are prepared once here (dtype cast, transpose to [K, N],
    padding to lane-dense multiples of 128) and cached on device, so the
    per-call work is only the pallas_call itself plus (if needed) padding of
    the small activation tensor.
    """

    def __init__(self, weight, bias, *, compute_dtype=jnp.bfloat16,
                 out_dtype=jnp.float32):
        # weight: [N, K] (torch Linear [out_features, in_features]); bias: [N]
        N, K = weight.shape
        assert bias.shape == (N,)
        self.N, self.K = N, K
        self.compute_dtype = compute_dtype
        self.out_dtype = out_dtype

        k_pad = _round_up(K, 128)
        n_pad = _round_up(N, 128)
        self.k_pad, self.n_pad = k_pad, n_pad

        # One-time weight prep, cached (NOT repeated per forward call).
        w = weight.astype(compute_dtype).T            # [K, N], compute dtype
        if k_pad != K or n_pad != N:
            w = jnp.pad(w, ((0, k_pad - K), (0, n_pad - N)))
        b = bias.astype(jnp.float32)
        if n_pad != N:
            b = jnp.pad(b, (0, n_pad - N))
        self.w_kn = w                                  # [k_pad, n_pad]
        self.b2d = b.reshape(1, n_pad)                 # [1, n_pad] f32

    def __call__(self, h, *, keep_padded: bool = False):
        M, K = h.shape
        assert K == self.K, "h feature dim must match weight in_features"
        k_pad, n_pad = self.k_pad, self.n_pad
        cdtype, odtype = self.compute_dtype, self.out_dtype

        # ---- M tiling: multiple of 16 (bf16 sublane packing), up to 256 rows.
        m16 = _round_up(M, 16)
        tm = m16 if m16 <= 256 else 256
        m_pad = _round_up(M, tm)
        m_tiles = m_pad // tm

        # ---- N tiling: largest lane-dense tile dividing n_pad.  If both M and
        # N fit a single tile, split N so a "parallel" grid axis has >= 2 steps
        # (keeps both TensorCores busy on v7x).
        candidates = (1024, 768, 512, 384, 256, 128)
        tn = next(c for c in candidates if c <= n_pad and n_pad % c == 0)
        if m_tiles == 1 and n_pad // tn == 1 and n_pad >= 256:
            tn = next(c for c in candidates
                      if c <= n_pad and n_pad % c == 0 and n_pad // c >= 2)
        n_tiles = n_pad // tn

        # ---- VMEM budget (double-buffered tiles) vs. device capacity.
        csize = jnp.dtype(cdtype).itemsize
        osize = jnp.dtype(odtype).itemsize
        est_vmem = (2 * (tm * k_pad) * csize      # h tile
                    + 2 * (k_pad * tn) * csize    # weight tile
                    + 2 * (tm * tn) * osize       # out tile
                    + 2 * tn * 4)                 # bias tile
        vmem_cap = _vmem_capacity_bytes()
        assert est_vmem < int(0.45 * vmem_cap), (
            "K too large for untiled reduction on this chip; "
            "reintroduce K tiling")
        vmem_limit = int(min(0.6 * vmem_cap,
                             max(16 * 1024 * 1024, 2 * est_vmem)))

        # ---- per-call activation prep (small; no weight touched here).
        h_c = h.astype(cdtype)
        if m_pad != M or k_pad != K:
            h_c = jnp.pad(h_c, ((0, m_pad - M), (0, k_pad - K)))

        cost = pl.CostEstimate(
            flops=2 * m_pad * n_pad * k_pad,
            transcendentals=0,
            bytes_accessed=(m_pad * k_pad * csize      # activations (read once)
                            + k_pad * n_pad * csize    # weight (read once)
                            + m_pad * n_pad * osize    # output writeback
                            + n_pad * 4),              # bias
        )

        out_padded = pl.pallas_call(
            _linear_kernel,
            out_shape=jax.ShapeDtypeStruct((m_pad, n_pad), odtype),
            grid_spec=pltpu.PrefetchScalarGridSpec(
                num_scalar_prefetch=0,
                # Weight-stationary: outer axis j walks N tiles, inner axis i
                # walks M tiles, so the weight block index is constant across
                # the inner loop and each weight tile is DMA'd exactly once.
                grid=(n_tiles, m_tiles),
                in_specs=[
                    pl.BlockSpec((tm, k_pad), lambda j, i: (i, 0)),   # h rows
                    pl.BlockSpec((k_pad, tn), lambda j, i: (0, j)),   # W cols
                    pl.BlockSpec((1, tn), lambda j, i: (0, j)),       # bias
                ],
                out_specs=pl.BlockSpec((tm, tn), lambda j, i: (i, j)),
            ),
            compiler_params=pltpu.CompilerParams(
                dimension_semantics=("parallel", "parallel"),
                vmem_limit_bytes=vmem_limit,
            ),
            cost_estimate=cost,
        )(h_c, self.w_kn, self.b2d)

        if keep_padded or (m_pad == M and n_pad == self.N):
            return out_padded
        return out_padded[:M, :self.N]


if __name__ == "__main__":
    # Small shapes consistent with the module (default input_dim=output_dim=768,
    # scaled down): batch M=8, input_dim K=256, output_dim N=128.
    M, K, N = 8, 256, 128

    key = jax.random.PRNGKey(0)
    k_h, k_w, k_b = jax.random.split(key, 3)

    h = jax.random.normal(k_h, (M, K), dtype=jnp.float32)
    # Deterministic synthetic parameters (no checkpoint loading).
    weight = jax.random.normal(k_w, (N, K), dtype=jnp.float32) * 0.02  # [out, in]
    bias = jax.random.normal(k_b, (N,), dtype=jnp.float32) * 0.01

    clf = LinearClassifierPallas(weight, bias)   # one-time cached weight prep
    out = clf(h)
    out = jax.block_until_ready(out)

    # Reference check against plain JAX (same math as torch.nn.Linear).
    # bf16 operand streaming with f32 accumulation -> loose-but-safe tolerance.
    ref = h @ weight.T + bias
    assert out.shape == (M, N)
    assert jnp.allclose(out, ref, atol=2e-2, rtol=2e-2), float(
        jnp.max(jnp.abs(out - ref))
    )

    print("KERNEL_OK")
</pallas_src>

<mosaic_0001>
module attributes {stable_mosaic.version = 11 : i64} {
  func.func @_linear_kernel(%arg0: i32, %arg1: i32, %arg2: memref<16x256xbf16, #tpu.memory_space<vmem>>, %arg3: memref<256x128xbf16, #tpu.memory_space<vmem>>, %arg4: memref<1x128xf32, #tpu.memory_space<vmem>>, %arg5: memref<16x128xf32, #tpu.memory_space<vmem>>) attributes {dimension_semantics = [#tpu.dimension_semantics<parallel>, #tpu.dimension_semantics<parallel>], iteration_bounds = array<i64: 1, 1>, scalar_prefetch = 0 : i64, scratch_operands = 0 : i64, tpu.core_type = #tpu.core_type<tc>, window_params = [{transform_indices = @transform_0, window_bounds = array<i64: 16, 256>}, {transform_indices = @transform_1, window_bounds = array<i64: 256, 128>}, {transform_indices = @transform_2, window_bounds = array<i64: 1, 128>}, {transform_indices = @transform_3, window_bounds = array<i64: 16, 128>}]} {
    %c0 = arith.constant 0 : index
    %c0_0 = arith.constant 0 : index
    %0 = vector.load %arg2[%c0, %c0_0] : memref<16x256xbf16, #tpu.memory_space<vmem>>, vector<16x256xbf16>
    %c0_1 = arith.constant 0 : index
    %c0_2 = arith.constant 0 : index
    %1 = vector.load %arg3[%c0_1, %c0_2] : memref<256x128xbf16, #tpu.memory_space<vmem>>, vector<256x128xbf16>
    %cst = arith.constant dense<0.000000e+00> : vector<16x128xf32>
    %2 = tpu.matmul %0, %1, %cst {dimension_numbers = #tpu.dot_dimension_numbers<[1], [0], [0], [1], [0, 0, 1, 1], [], []>} : vector<16x256xbf16>, vector<256x128xbf16>, vector<16x128xf32> -> vector<16x128xf32>
    %c0_3 = arith.constant 0 : index
    %c0_4 = arith.constant 0 : index
    %3 = vector.load %arg4[%c0_3, %c0_4] : memref<1x128xf32, #tpu.memory_space<vmem>>, vector<1x128xf32>
    %4 = vector.broadcast %3 : vector<1x128xf32> to vector<16x128xf32>
    %5 = arith.addf %2, %4 : vector<16x128xf32>
    %c0_5 = arith.constant 0 : index
    %c0_6 = arith.constant 0 : index
    %6 = vector.load %arg5[%c0_5, %c0_6] : memref<16x128xf32, #tpu.memory_space<vmem>>, vector<16x128xf32>
    tpu.vector_store %arg5[%c0_5, %c0_6], %5 {strides = array<i32>} : memref<16x128xf32, #tpu.memory_space<vmem>>, vector<16x128xf32>,
    return
  }
  func.func @transform_0(%arg0: i32, %arg1: i32) -> (i32, i32) {
    %c0_i32 = arith.constant 0 : i32
    %c0_i32_0 = arith.constant 0 : i32
    return %arg1, %c0_i32 : i32, i32
  }
  func.func @transform_1(%arg0: i32, %arg1: i32) -> (i32, i32) {
    %c0_i32 = arith.constant 0 : i32
    %c0_i32_0 = arith.constant 0 : i32
    return %c0_i32, %arg0 : i32, i32
  }
  func.func @transform_2(%arg0: i32, %arg1: i32) -> (i32, i32) {
    %c0_i32 = arith.constant 0 : i32
    %c0_i32_0 = arith.constant 0 : i32
    return %c0_i32, %arg0 : i32, i32
  }
  func.func @transform_3(%arg0: i32, %arg1: i32) -> (i32, i32) {
    %c0_i32 = arith.constant 0 : i32
    return %arg1, %arg0 : i32, i32
  }
}

</mosaic_0001>

<llo_original>
// kernel: tpu_custom_call.1
$region0: #{tpu_custom_call.1}
  #allocation0 [shape = 'u32[]', space=smem, size = 0x4, offset = 0x4, fixed_abs, tag = 'smem constant byte address 0x4 - core index']
  #allocation1 [shape = 'u32[144,128]{1,0:T(1,128)}', space=vmem, size = 0x12000, scoped, tag = 'internal scratch']
  %s0 = inlined_call_operand.hbm [shape: bf16[16,256], index: 0, kind: input, shape index: {}]
  %s1 = inlined_call_operand.hbm [shape: bf16[256,128], index: 1, kind: input, shape index: {}]
  %s2 = inlined_call_operand.vmem [shape: f32[1,128], index: 2, kind: input, shape index: {}]
  %s3 = inlined_call_operand.hbm [shape: f32[16,128], index: 3, kind: output, shape index: {}]
  %s4 = sld [smem:[#allocation0]]
  $region30: #{tpu_custom_call.1} parent=0
    _
  %s6 = ssub.s32 1, %s4
  %s7 = scalar_select 0, %s6, %s4
  $region1: #{tpu_custom_call.1} parent=0
    #allocation2 [shape = 'u8[8192]{0}', space=vmem, size = 0x2000, scoped, tag = 'input window, operand 0, single buffered']
    #allocation3 [shape = 's32[1]{0}', space=sflag, size = 0x4, scoped, tag = 'scoped memory for tpu_custom_call.1']
    #allocation4 [shape = 's32[1]{0}', space=sflag, size = 0x4, scoped, tag = 'scoped memory for tpu_custom_call.1']
    #allocation5 [shape = 'u8[65536]{0}', space=vmem, size = 0x10000, scoped, tag = 'input window, operand 1, single buffered']
    #allocation6 [shape = 's32[1]{0}', space=sflag, size = 0x4, scoped, tag = 'scoped memory for tpu_custom_call.1']
    #allocation7 [shape = 'u8[8192]{0}', space=vmem, size = 0x2000, scoped, tag = 'output window, operand 0, single buffered']
    %8 = vsyncpa [#allocation3], 0
    %9 = vsyncpa [#allocation6], 0
    %10 = vsyncpa [#allocation4], 0
    // Predicated region
    $region2: #{tpu_custom_call.1} parent=1 // pred_check
      _
    $region3: #{tpu_custom_call.1} parent=1 // pred_check_branch
      %12 = sbr.rel (0) target = $region5
    $region4: #{tpu_custom_call.1} parent=1 // pred_region
      %s14 = ssub.s32 256, 256
      %15 = vsyncadd [#allocation3], %s14
      %s16 = sshll.u32 [#allocation2], 4
      %s17 = int_to_ptr.vmem [resolvable:$true] %s16
      %22 = dma.hbm_to_vmem [thread:$0]  %s0, 256, %s17, [#allocation3], 128, 128, 8
    $region5: #{tpu_custom_call.1} parent=1 // pred_fallthru
      _
    // Predicated region
    $region6: #{tpu_custom_call.1} parent=1 // pred_check
      _
    $region7: #{tpu_custom_call.1} parent=1 // pred_check_branch
      %24 = sbr.rel (0) target = $region9
    $region8: #{tpu_custom_call.1} parent=1 // pred_region
      %s26 = ssub.s32 2048, 2048
      %27 = vsyncadd [#allocation6], %s26
      %s28 = sshll.u32 [#allocation5], 4
      %s29 = int_to_ptr.vmem [resolvable:$true] %s28
      %34 = dma.hbm_to_vmem [thread:$0]  %s1, 2048, %s29, [#allocation6], 64, 64, 4
    $region9: #{tpu_custom_call.1} parent=1 // pred_fallthru
      _
    // Predicated region
    $region10: #{tpu_custom_call.1} parent=1 // pred_check
      _
    $region11: #{tpu_custom_call.1} parent=1 // pred_check_branch
      %36 = sbr.rel (0) target = $region13
    $region12: #{tpu_custom_call.1} parent=1 // pred_region
      _
    $region13: #{tpu_custom_call.1} parent=1 // pred_fallthru
      _
    // Predicated region
    $region14: #{tpu_custom_call.1} parent=1 // pred_check
      _
    $region15: #{tpu_custom_call.1} parent=1 // pred_check_branch
      %38 = sbr.rel (0) target = $region17
    $region16: #{tpu_custom_call.1} parent=1 // pred_region
      %39 = dma.done [#allocation3], 256
    $region17: #{tpu_custom_call.1} parent=1 // pred_fallthru
      _
    // Predicated region
    $region18: #{tpu_custom_call.1} parent=1 // pred_check
      _
    $region19: #{tpu_custom_call.1} parent=1 // pred_check_branch
      %41 = sbr.rel (0) target = $region21
    $region20: #{tpu_custom_call.1} parent=1 // pred_region
      %42 = dma.done [#allocation6], 2048
    $region21: #{tpu_custom_call.1} parent=1 // pred_fallthru
      _
    %v44 = vld [vmem:[#allocation2] sm:$0xff]
    %v45 = vld [vmem:[#allocation2 + $0x8] sm:$0xff]
    %v46 = vld [vmem:[#allocation5] sm:$0xf]
    %v47 = vld [vmem:[#allocation5 + $0x4] sm:$0xf]
    %v48 = vld [vmem:[#allocation5 + $0x8] sm:$0xf]
    %v49 = vld [vmem:[#allocation5 + $0xc] sm:$0xf]
    %v50 = vld [vmem:[#allocation5 + $0x10] sm:$0xf]
    %v51 = vld [vmem:[#allocation5 + $0x14] sm:$0xf]
    %v52 = vld [vmem:[#allocation5 + $0x18] sm:$0xf]
    %v53 = vld [vmem:[#allocation5 + $0x1c] sm:$0xf]
    %v54 = vld [vmem:[#allocation5 + $0x20] sm:$0xf]
    %v55 = vld [vmem:[#allocation5 + $0x24] sm:$0xf]
    %v56 = vld [vmem:[#allocation5 + $0x28] sm:$0xf]
    %v57 = vld [vmem:[#allocation5 + $0x2c] sm:$0xf]
    %v58 = vld [vmem:[#allocation5 + $0x30] sm:$0xf]
    %v59 = vld [vmem:[#allocation5 + $0x34] sm:$0xf]
    %v60 = vld [vmem:[#allocation5 + $0x38] sm:$0xf]
    %v61 = vld [vmem:[#allocation5 + $0x3c] sm:$0xf]
    %v62 = vld [vmem:[#allocation5 + $0x40] sm:$0xf]
    %v63 = vld [vmem:[#allocation5 + $0x44] sm:$0xf]
    %v64 = vld [vmem:[#allocation5 + $0x48] sm:$0xf]
    %v65 = vld [vmem:[#allocation5 + $0x4c] sm:$0xf]
    %v66 = vld [vmem:[#allocation5 + $0x50] sm:$0xf]
    %v67 = vld [vmem:[#allocation5 + $0x54] sm:$0xf]
    %v68 = vld [vmem:[#allocation5 + $0x58] sm:$0xf]
    %v69 = vld [vmem:[#allocation5 + $0x5c] sm:$0xf]
    %v70 = vld [vmem:[#allocation5 + $0x60] sm:$0xf]
    %v71 = vld [vmem:[#allocation5 + $0x64] sm:$0xf]
    %v72 = vld [vmem:[#allocation5 + $0x68] sm:$0xf]
    %v73 = vld [vmem:[#allocation5 + $0x6c] sm:$0xf]
    %v74 = vld [vmem:[#allocation5 + $0x70] sm:$0xf]
    %v75 = vld [vmem:[#allocation5 + $0x74] sm:$0xf]
    %v76 = vld [vmem:[#allocation5 + $0x78] sm:$0xf]
    %v77 = vld [vmem:[#allocation5 + $0x7c] sm:$0xf]
    %v78 = vld [vmem:[%s2] sm:$0x1]
    %v80 = vlaneseq
    %v81 = vshrl.u32 %v80, 7
    %v82 = vsub.s32 0, %v81
    %v83 = vrot.slane %v78, %v82
    %v87 = vunpack.c.l.b16 %v44
    %v88 = vunpack.c.h.b16 %v44
    %v89 = vunpack.c.l.b16 %v45
    %v90 = vunpack.c.h.b16 %v45
    %v91 = vpack.c.b16 %v89, %v87
    %v92 = vpack.c.b16 %v90, %v88
    %v127 = vunpack.c.l.b16 %v46
    %v128 = vunpack.c.l.b16 %v47
    %v129 = vunpack.c.l.b16 %v48
    %v130 = vunpack.c.l.b16 %v49
    %v131 = vunpack.c.l.b16 %v50
    %v132 = vunpack.c.l.b16 %v51
    %v133 = vunpack.c.l.b16 %v52
    %v134 = vunpack.c.l.b16 %v53
    %v135 = vunpack.c.l.b16 %v54
    %v136 = vunpack.c.l.b16 %v55
    %v137 = vunpack.c.l.b16 %v56
    %v138 = vunpack.c.l.b16 %v57
    %v139 = vunpack.c.l.b16 %v58
    %v140 = vunpack.c.l.b16 %v59
    %v141 = vunpack.c.l.b16 %v60
    %v142 = vunpack.c.l.b16 %v61
    %v143 = vunpack.c.l.b16 %v62
    %v144 = vunpack.c.l.b16 %v63
    %v145 = vunpack.c.l.b16 %v64
    %v146 = vunpack.c.l.b16 %v65
    %v147 = vunpack.c.l.b16 %v66
    %v148 = vunpack.c.l.b16 %v67
    %v149 = vunpack.c.l.b16 %v68
    %v150 = vunpack.c.l.b16 %v69
    %v151 = vunpack.c.l.b16 %v70
    %v152 = vunpack.c.l.b16 %v71
    %v153 = vunpack.c.l.b16 %v72
    %v154 = vunpack.c.l.b16 %v73
    %v155 = vunpack.c.l.b16 %v74
    %v156 = vunpack.c.l.b16 %v75
    %v157 = vunpack.c.l.b16 %v76
    %v158 = vunpack.c.l.b16 %v77
    %v159 = vpack.c.b16 %v128, %v127
    %v160 = vpack.c.b16 %v130, %v129
    %v161 = vpack.c.b16 %v132, %v131
    %v162 = vpack.c.b16 %v134, %v133
    %v163 = vpack.c.b16 %v136, %v135
    %v164 = vpack.c.b16 %v138, %v137
    %v165 = vpack.c.b16 %v140, %v139
    %v166 = vpack.c.b16 %v142, %v141
    %v167 = vpack.c.b16 %v144, %v143
    %v168 = vpack.c.b16 %v146, %v145
    %v169 = vpack.c.b16 %v148, %v147
    %v170 = vpack.c.b16 %v150, %v149
    %v171 = vpack.c.b16 %v152, %v151
    %v172 = vpack.c.b16 %v154, %v153
    %v173 = vpack.c.b16 %v156, %v155
    %v174 = vpack.c.b16 %v158, %v157
    %191 = vmatprep.subr.bf16.mxu0 0
    %192 = vmatpush1.bf16.msra.mxu0 %v166
    %193 = vmatprep.subr.bf16.mxu0 0
    %194 = vmatpush1.bf16.msra.mxu0 %v165
    %195 = vmatprep.subr.bf16.mxu0 0
    %196 = vmatpush1.bf16.msra.mxu0 %v164
    %197 = vmatprep.subr.bf16.mxu0 0
    %198 = vmatpush1.bf16.msra.mxu0 %v163
    %199 = vmatprep.subr.bf16.mxu0 0
    %200 = vmatpush1.bf16.msra.mxu0 %v162
    %201 = vmatprep.subr.bf16.mxu0 0
    %202 = vmatpush1.bf16.msra.mxu0 %v161
    %203 = vmatprep.subr.bf16.mxu0 0
    %204 = vmatpush1.bf16.msra.mxu0 %v160
    %205 = vmatprep.subr.bf16.mxu0 0
    %206 = vmatpush1.bf16.msra.mxu0 %v159
    %207 = vmatprep.subr.bf16.mxu0 0
    %208 = vmatpush2.bf16.msra.mxu0 %v174
    %209 = vmatprep.subr.bf16.mxu0 0
    %210 = vmatpush2.bf16.msra.mxu0 %v173
    %211 = vmatprep.subr.bf16.mxu0 0
    %212 = vmatpush2.bf16.msra.mxu0 %v172
    %213 = vmatprep.subr.bf16.mxu0 0
    %214 = vmatpush2.bf16.msra.mxu0 %v171
    %215 = vmatprep.subr.bf16.mxu0 0
    %216 = vmatpush2.bf16.msra.mxu0 %v170
    %217 = vmatprep.subr.bf16.mxu0 0
    %218 = vmatpush2.bf16.msra.mxu0 %v169
    %219 = vmatprep.subr.bf16.mxu0 0
    %220 = vmatpush2.bf16.msra.mxu0 %v168
    %221 = vmatprep.subr.bf16.mxu0 0
    %222 = vmatpush2.bf16.msra.mxu0 %v167
    %223 = vmatprep.mubr.bf16.mxu0 %v92
    %224 = vmatmul.mubr.bf16.gmra.mxu0 %v91
    %v225 = vpop.f32.mrf.mxu0
    %v226 = vadd.f32 %v83, %v225
    %v227 = vpop.f32.mrf.mxu0
    %v228 = vpop.f32.mrf.mxu0
    %v229 = vadd.f32 %v83, %v228
    %v230 = vpop.f32.mrf.mxu0
    %231 = vdwg.mxu0
    %232 = vst [vmem:[#allocation7] sm:$0xff] %v226
    %233 = vst [vmem:[#allocation7 + $0x8] sm:$0xff] %v229
    // Predicated region
    $region22: #{tpu_custom_call.1} parent=1 // pred_check
      _
    $region23: #{tpu_custom_call.1} parent=1 // pred_check_branch
      %235 = sbr.rel (0) target = $region25
    $region24: #{tpu_custom_call.1} parent=1 // pred_region
      %s237 = ssub.s32 256, 256
      %238 = vsyncadd [#allocation4], %s237
      %s239 = sshll.u32 [#allocation7], 4
      %s240 = int_to_ptr.vmem [resolvable:$true] %s239
      %245 = dma.vmem_to_hbm [thread:$0]  %s240, 256, %s3, [#allocation4], 128, 128, 8
    $region25: #{tpu_custom_call.1} parent=1 // pred_fallthru
      _
    // Predicated region
    $region26: #{tpu_custom_call.1} parent=1 // pred_check
      _
    $region27: #{tpu_custom_call.1} parent=1 // pred_check_branch
      %247 = sbr.rel (0) target = $region29
    $region28: #{tpu_custom_call.1} parent=1 // pred_region
      %248 = dma.done [#allocation4], 256
    $region29: #{tpu_custom_call.1} parent=1 // pred_fallthru
      _
    %249 = vsyncpa [#allocation3], 1
    %250 = vsyncpa [#allocation6], 1
    %251 = vsyncpa [#allocation4], 1

</llo_original>
